<compile_context>
chip_gen: v7x
topology: tpu7x:2x2x1
jax: 0.10.0
libtpu: 0.0.40
codegen_flags: <defaults>
</compile_context>

<pallas_src>
import jax
import jax.numpy as jnp
from jax import lax
from jax.experimental import pallas as pl
from jax.experimental.pallas import tpu as pltpu

THRESHOLD = 1.0


# ---------------------------------------------------------------------------
# Kernels
# ---------------------------------------------------------------------------
def _synaptic_step(curr_f32, params_ref, spk_ref, syn_ref, mem_ref,
                   syn0_ref=None, mem0_ref=None):
    """Shared Synaptic-neuron update; syn_ref/mem_ref are resident output blocks."""
    t = pl.program_id(1)  # grid = (batch_tiles, T); time is the inner ("arbitrary") axis

    @pl.when(t == 0)
    def _():
        if syn0_ref is None:          # zero-init fast path (module's init_synaptic())
            syn_ref[...] = jnp.zeros_like(syn_ref)
            mem_ref[...] = jnp.zeros_like(mem_ref)
        else:
            syn_ref[...] = syn0_ref[...]
            mem_ref[...] = mem0_ref[...]

    alpha = params_ref[0]
    beta = params_ref[1]
    threshold = params_ref[2]

    syn_prev = syn_ref[...]
    mem_prev = mem_ref[...]

    reset = (mem_prev - threshold > 0.0).astype(jnp.float32)       # Heaviside(prev mem)
    syn_new = alpha * syn_prev + curr_f32
    mem_new = beta * mem_prev + syn_new - reset * threshold        # subtract reset
    spk = (mem_new - threshold > 0.0).astype(jnp.float32)

    spk_ref[0] = spk.astype(spk_ref.dtype)                         # bf16 store: 0/1 lossless
    syn_ref[...] = syn_new
    mem_ref[...] = mem_new


def _negsum_curr(x_ref, out_shape):
    # W ≡ -1  =>  curr[:, j] = -sum_n x[:, n] for every output neuron j.
    row_sum = jnp.sum(x_ref[0].astype(jnp.float32), axis=-1, keepdims=True)  # XLU reduce
    return jnp.broadcast_to(-row_sum, out_shape)                              # VPU broadcast


def _matmul_curr(x_ref, w_ref):
    # W is pre-transposed to (N, out_sz); contract x(tb,N) with W(N,out) directly.
    return lax.dot_general(
        x_ref[0], w_ref[...],
        dimension_numbers=(((1,), (0,)), ((), ())),
        preferred_element_type=jnp.float32,
    )


def _negsum_zero_kernel(params_ref, x_ref, spk_ref, syn_ref, mem_ref):
    curr = _negsum_curr(x_ref, syn_ref.shape)
    _synaptic_step(curr, params_ref, spk_ref, syn_ref, mem_ref)


def _negsum_state_kernel(params_ref, x_ref, syn0_ref, mem0_ref, spk_ref, syn_ref, mem_ref):
    curr = _negsum_curr(x_ref, syn_ref.shape)
    _synaptic_step(curr, params_ref, spk_ref, syn_ref, mem_ref, syn0_ref, mem0_ref)


def _matmul_zero_kernel(params_ref, x_ref, w_ref, spk_ref, syn_ref, mem_ref):
    curr = _matmul_curr(x_ref, w_ref)
    _synaptic_step(curr, params_ref, spk_ref, syn_ref, mem_ref)


def _matmul_state_kernel(params_ref, x_ref, w_ref, syn0_ref, mem0_ref,
                         spk_ref, syn_ref, mem_ref):
    curr = _matmul_curr(x_ref, w_ref)
    _synaptic_step(curr, params_ref, spk_ref, syn_ref, mem_ref, syn0_ref, mem0_ref)


# ---------------------------------------------------------------------------
# Generation-aware sizing helpers
# ---------------------------------------------------------------------------
def _vmem_budget_bytes():
    """Half the chip's physical VMEM (v5e/v6e: ~64 MiB, v7x: ~32 MiB)."""
    phys = None
    try:
        info = pltpu.get_tpu_info()
        for name in ("vmem_capacity_bytes", "vmem_size_bytes", "vmem_bytes"):
            v = getattr(info, name, None)
            if v:
                phys = int(v)
                break
    except Exception:
        phys = None
    if not phys:
        phys = 64 * 1024 * 1024          # conservative fallback (v7x-sized)
    return max(16 * 1024 * 1024, phys // 2)


def _num_tensorcores():
    try:
        d = jax.devices()[0]
        for attr in ("num_cores", "core_count"):
            v = getattr(d, attr, None)
            if v:
                return max(1, int(v))
    except Exception:
        pass
    return 1


def _pick_batch_tile(B, per_row_bytes, fixed_bytes, vmem_budget, min_tiles, cap=None):
    """Largest batch tile (multiple of 8 or == B, divisor of B) within the VMEM budget,
    preferring >= min_tiles tiles so the 'parallel' axis can shard across TensorCores."""
    avail = max(0, vmem_budget - fixed_bytes)
    max_tb = avail // max(1, per_row_bytes)
    if cap is not None:
        max_tb = min(max_tb, int(cap))
    cands = sorted(d for d in range(1, B + 1) if B % d == 0 and (d % 8 == 0 or d == B))
    ok = [d for d in cands if d <= max_tb and B // d >= min_tiles]
    if ok:
        return max(ok)
    ok = [d for d in cands if d <= max_tb]
    if ok:
        return max(ok)
    return cands[0]


# ---------------------------------------------------------------------------
# Wrappers
# ---------------------------------------------------------------------------
def readout_forward_seq(x_seq, weight, syn, mem, alpha, beta, threshold=THRESHOLD,
                        *, neg_one_weight=False, spk_dtype=jnp.bfloat16,
                        zero_init=None, batch_tile=None):
    """x_seq: (T, B, N) (any float dtype; pass bf16 spikes to halve the x DMA),
    weight: (out_sz, N) PyTorch layout, syn/mem: (B, out_sz) or None (zero init).

    Returns (spk_seq, syn_final, mem_final): (T, B, out_sz) in spk_dtype, (B, out_sz) f32 x2.
    """
    x_seq = jnp.asarray(x_seq)
    T, B, N = x_seq.shape
    out_sz = weight.shape[0]

    if zero_init is None:
        zero_init = (syn is None) and (mem is None)

    x_item = jnp.dtype(x_seq.dtype).itemsize
    spk_item = jnp.dtype(spk_dtype).itemsize

    # Per-batch-row VMEM estimate (double-buffered streams + resident f32 state outputs).
    per_row = 2 * N * x_item + 2 * out_sz * spk_item + 2 * 2 * out_sz * 4
    if not zero_init:
        per_row += 2 * 2 * out_sz * 4
    fixed = 1 << 20                                  # slack for params / misc
    if not neg_one_weight:
        fixed += 2 * N * out_sz * x_item             # weight (double-buffered)

    vmem_budget = _vmem_budget_bytes()
    tb = _pick_batch_tile(B, per_row, fixed, vmem_budget, _num_tensorcores(),
                          cap=batch_tile)
    nb = B // tb

    params = jnp.array([alpha, beta, threshold], dtype=jnp.float32)

    smem_spec = pl.BlockSpec(memory_space=pltpu.MemorySpace.SMEM)
    x_spec = pl.BlockSpec((1, tb, N), lambda b, t: (t, b, 0))
    state_spec = pl.BlockSpec((tb, out_sz), lambda b, t: (b, 0))
    spk_spec = pl.BlockSpec((1, tb, out_sz), lambda b, t: (t, b, 0))

    out_shape = (
        jax.ShapeDtypeStruct((T, B, out_sz), spk_dtype),
        jax.ShapeDtypeStruct((B, out_sz), jnp.float32),
        jax.ShapeDtypeStruct((B, out_sz), jnp.float32),
    )
    cparams = pltpu.CompilerParams(
        dimension_semantics=("parallel", "arbitrary"),
        vmem_limit_bytes=int(vmem_budget),
    )

    in_arrays = [params, x_seq]
    in_specs = [smem_spec, x_spec]

    if not neg_one_weight:
        # One-time host-side transpose to (N, out_sz); dtype matched to x so the MXU
        # runs at the input's rate (bf16 spikes -> bf16 matmul, f32 -> f32).
        w_p = jnp.asarray(weight).astype(x_seq.dtype).T
        in_arrays.append(w_p)
        in_specs.append(pl.BlockSpec((N, out_sz), lambda b, t: (0, 0)))

    if not zero_init:
        syn_p = (jnp.zeros((B, out_sz), jnp.float32) if syn is None
                 else jnp.asarray(syn).astype(jnp.float32))
        mem_p = (jnp.zeros((B, out_sz), jnp.float32) if mem is None
                 else jnp.asarray(mem).astype(jnp.float32))
        in_arrays += [syn_p, mem_p]
        in_specs += [state_spec, state_spec]

    kernel = {
        (True, True): _negsum_zero_kernel,
        (True, False): _negsum_state_kernel,
        (False, True): _matmul_zero_kernel,
        (False, False): _matmul_state_kernel,
    }[(bool(neg_one_weight), bool(zero_init))]

    spk, syn_new, mem_new = pl.pallas_call(
        kernel,
        grid=(nb, T),
        in_specs=in_specs,
        out_specs=[spk_spec, state_spec, state_spec],
        out_shape=out_shape,
        compiler_params=cparams,
    )(*in_arrays)

    return spk, syn_new, mem_new


def readout_forward(x, weight, syn, mem, alpha, beta, threshold=THRESHOLD, **kw):
    """Single-timestep API (matches the PyTorch module's per-call stateful forward)."""
    kw.setdefault("zero_init", False)
    spk_seq, syn_new, mem_new = readout_forward_seq(
        x[None], weight, syn, mem, alpha, beta, threshold, **kw)
    return spk_seq[0], syn_new, mem_new


# ---------------------------------------------------------------------------
# Pure-JAX reference
# ---------------------------------------------------------------------------
def readout_reference_seq(x_seq, weight, syn, mem, alpha, beta, threshold=THRESHOLD):
    x_seq = jnp.asarray(x_seq).astype(jnp.float32)
    weight = jnp.asarray(weight).astype(jnp.float32)
    B = x_seq.shape[1]
    out_sz = weight.shape[0]
    syn = jnp.zeros((B, out_sz), jnp.float32) if syn is None else jnp.asarray(syn).astype(jnp.float32)
    mem = jnp.zeros((B, out_sz), jnp.float32) if mem is None else jnp.asarray(mem).astype(jnp.float32)
    spks = []
    for t in range(x_seq.shape[0]):
        curr = jnp.einsum("bn,on->bo", x_seq[t], weight,
                          precision=lax.Precision.HIGHEST)
        reset = (mem - threshold > 0.0).astype(jnp.float32)
        syn = alpha * syn + curr
        mem = beta * mem + syn - reset * threshold
        spks.append((mem - threshold > 0.0).astype(jnp.float32))
    return jnp.stack(spks), syn, mem


# ---------------------------------------------------------------------------
# Demo / self-check
# ---------------------------------------------------------------------------
if __name__ == "__main__":
    T, B, N, out_sz = 6, 8, 32, 16
    alpha, beta = 0.9, 0.8

    key = jax.random.PRNGKey(0)
    kx, kw, ks, km = jax.random.split(key, 4)

    # Spike-like reservoir outputs; pass as bf16 (exactly 0/1) to halve the x DMA.
    x_seq = (jax.random.uniform(kx, (T, B, N)) < 0.3).astype(jnp.bfloat16)

    # Module init: weight = ones(out_sz, N) * -1.0, zero synaptic state (init_synaptic()).
    w_module = jnp.full((out_sz, N), -1.0, jnp.float32)

    # 1) Default module path: -1 weight + zero init -> negated row-sum fast path
    #    (no weight DMA / MXU, no state-input streams, bf16 spike writeback).
    spk_f, syn_f, mem_f = readout_forward_seq(
        x_seq, w_module, None, None, alpha, beta, neg_one_weight=True)
    jax.block_until_ready(spk_f)
    spk_r, syn_r, mem_r = readout_reference_seq(x_seq, w_module, None, None, alpha, beta)
    assert jnp.array_equal(spk_f.astype(jnp.float32), spk_r), "spk mismatch (negsum/zero)"
    assert jnp.allclose(syn_f, syn_r, atol=1e-5), "syn mismatch (negsum/zero)"
    assert jnp.allclose(mem_f, mem_r, atol=1e-5), "mem mismatch (negsum/zero)"

    # 2) General trained weight + explicit (nonzero) carried state, f32 inputs,
    #    in-kernel MXU contraction against the pre-transposed weight.
    w_rand = jax.random.normal(kw, (out_sz, N), jnp.float32) * 0.2
    syn0 = jax.random.normal(ks, (B, out_sz), jnp.float32) * 0.1
    mem0 = jax.random.normal(km, (B, out_sz), jnp.float32) * 0.1
    x32 = x_seq.astype(jnp.float32)
    spk_g, syn_g, mem_g = readout_forward_seq(
        x32, w_rand, syn0, mem0, alpha, beta, neg_one_weight=False)
    jax.block_until_ready(spk_g)
    spk_gr, syn_gr, mem_gr = readout_reference_seq(x32, w_rand, syn0, mem0, alpha, beta)
    assert jnp.array_equal(spk_g.astype(jnp.float32), spk_gr), "spk mismatch (matmul/state)"
    assert jnp.allclose(syn_g, syn_gr, atol=1e-4), "syn mismatch (matmul/state)"
    assert jnp.allclose(mem_g, mem_gr, atol=1e-4), "mem mismatch (matmul/state)"

    # 3) Single-timestep stateful API (like the module's per-call forward), with a real
    #    (non-vacuous) check of spk/syn/mem against a one-step reference.
    spk1, syn1, mem1 = readout_forward(
        x_seq[0], w_module, syn0, mem0, alpha, beta, neg_one_weight=True)
    jax.block_until_ready(spk1)
    spk1_r, syn1_r, mem1_r = readout_reference_seq(
        x_seq[:1], w_module, syn0, mem0, alpha, beta)
    assert jnp.array_equal(spk1.astype(jnp.float32), spk1_r[0]), "spk mismatch (single-step)"
    assert jnp.allclose(syn1, syn1_r, atol=1e-5), "syn mismatch (single-step)"
    assert jnp.allclose(mem1, mem1_r, atol=1e-5), "mem mismatch (single-step)"

    print("KERNEL_OK")
</pallas_src>

<mosaic_0001>
module attributes {stable_mosaic.version = 11 : i64} {
  func.func @_negsum_zero_kernel(%arg0: i32, %arg1: i32, %arg2: memref<3xf32, #tpu.memory_space<smem>>, %arg3: memref<1x8x32xbf16, #tpu.memory_space<vmem>>, %arg4: memref<1x8x16xbf16, #tpu.memory_space<vmem>>, %arg5: memref<8x16xf32, #tpu.memory_space<vmem>>, %arg6: memref<8x16xf32, #tpu.memory_space<vmem>>) attributes {dimension_semantics = [#tpu.dimension_semantics<parallel>, #tpu.dimension_semantics<arbitrary>], iteration_bounds = array<i64: 1, 6>, scalar_prefetch = 0 : i64, scratch_operands = 0 : i64, tpu.core_type = #tpu.core_type<tc>, window_params = [{transform_indices = @transform_0, window_bounds = array<i64: 3>}, {transform_indices = @transform_1, window_bounds = array<i64: 1, 8, 32>}, {transform_indices = @transform_2, window_bounds = array<i64: 1, 8, 16>}, {transform_indices = @transform_3, window_bounds = array<i64: 8, 16>}, {transform_indices = @transform_4, window_bounds = array<i64: 8, 16>}]} {
    %c0 = arith.constant 0 : index
    %c0_0 = arith.constant 0 : index
    %c0_1 = arith.constant 0 : index
    %0 = vector.load %arg3[%c0, %c0_0, %c0_1] : memref<1x8x32xbf16, #tpu.memory_space<vmem>>, vector<1x8x32xbf16>
    %1 = vector.shape_cast %0 : vector<1x8x32xbf16> to vector<8x32xbf16>
    %2 = arith.extf %1 : vector<8x32xbf16> to vector<8x32xf32>
    %cst = arith.constant dense<0.000000e+00> : vector<8xf32>
    %3 = vector.multi_reduction <add>, %2, %cst [1] : vector<8x32xf32> to vector<8xf32>
    %4 = vector.shape_cast %3 : vector<8xf32> to vector<8x1xf32>
    %cst_2 = arith.constant 0.000000e+00 : f32
    %5 = vector.broadcast %cst_2 : f32 to vector<8x1xf32>
    %6 = arith.subf %5, %4 : vector<8x1xf32>
    %7 = vector.shape_cast %6 : vector<8x1xf32> to vector<8x1xf32>
    %8 = vector.broadcast %7 : vector<8x1xf32> to vector<8x16xf32>
    %c0_i32 = arith.constant 0 : i32
    %9 = arith.cmpi eq, %arg1, %c0_i32 : i32
    %10 = arith.extui %9 : i1 to i32
    %c0_i32_3 = arith.constant 0 : i32
    %11 = arith.cmpi ne, %10, %c0_i32_3 : i32
    scf.if %11 {
      %cst_18 = arith.constant 0.000000e+00 : f32
      %44 = vector.broadcast %cst_18 : f32 to vector<8x16xf32>
      %c0_19 = arith.constant 0 : index
      %c0_20 = arith.constant 0 : index
      %45 = vector.load %arg5[%c0_19, %c0_20] : memref<8x16xf32, #tpu.memory_space<vmem>>, vector<8x16xf32>
      tpu.vector_store %arg5[%c0_19, %c0_20], %44 {strides = array<i32>} : memref<8x16xf32, #tpu.memory_space<vmem>>, vector<8x16xf32>,
      %cst_21 = arith.constant 0.000000e+00 : f32
      %46 = vector.broadcast %cst_21 : f32 to vector<8x16xf32>
      %c0_22 = arith.constant 0 : index
      %c0_23 = arith.constant 0 : index
      %47 = vector.load %arg6[%c0_22, %c0_23] : memref<8x16xf32, #tpu.memory_space<vmem>>, vector<8x16xf32>
      tpu.vector_store %arg6[%c0_22, %c0_23], %46 {strides = array<i32>} : memref<8x16xf32, #tpu.memory_space<vmem>>, vector<8x16xf32>,
    } else {
    }
    %c0_4 = arith.constant 0 : index
    %12 = memref.load %arg2[%c0_4] : memref<3xf32, #tpu.memory_space<smem>>
    %c1 = arith.constant 1 : index
    %13 = memref.load %arg2[%c1] : memref<3xf32, #tpu.memory_space<smem>>
    %c2 = arith.constant 2 : index
    %14 = memref.load %arg2[%c2] : memref<3xf32, #tpu.memory_space<smem>>
    %c0_5 = arith.constant 0 : index
    %c0_6 = arith.constant 0 : index
    %15 = vector.load %arg5[%c0_5, %c0_6] : memref<8x16xf32, #tpu.memory_space<vmem>>, vector<8x16xf32>
    %c0_7 = arith.constant 0 : index
    %c0_8 = arith.constant 0 : index
    %16 = vector.load %arg6[%c0_7, %c0_8] : memref<8x16xf32, #tpu.memory_space<vmem>>, vector<8x16xf32>
    %17 = vector.broadcast %14 : f32 to vector<8x16xf32>
    %18 = arith.subf %16, %17 : vector<8x16xf32>
    %cst_9 = arith.constant 0.000000e+00 : f32
    %19 = vector.broadcast %cst_9 : f32 to vector<8x16xf32>
    %20 = arith.cmpf ogt, %18, %19 : vector<8x16xf32>
    %21 = arith.extui %20 : vector<8x16xi1> to vector<8x16xi32>
    %22 = arith.sitofp %21 : vector<8x16xi32> to vector<8x16xf32>
    %23 = vector.broadcast %12 : f32 to vector<8x16xf32>
    %24 = arith.mulf %23, %15 : vector<8x16xf32>
    %25 = arith.addf %24, %8 : vector<8x16xf32>
    %26 = vector.broadcast %13 : f32 to vector<8x16xf32>
    %27 = arith.mulf %26, %16 : vector<8x16xf32>
    %28 = arith.addf %27, %25 : vector<8x16xf32>
    %29 = vector.broadcast %14 : f32 to vector<8x16xf32>
    %30 = arith.mulf %22, %29 : vector<8x16xf32>
    %31 = arith.subf %28, %30 : vector<8x16xf32>
    %32 = vector.broadcast %14 : f32 to vector<8x16xf32>
    %33 = arith.subf %31, %32 : vector<8x16xf32>
    %cst_10 = arith.constant 0.000000e+00 : f32
    %34 = vector.broadcast %cst_10 : f32 to vector<8x16xf32>
    %35 = arith.cmpf ogt, %33, %34 : vector<8x16xf32>
    %36 = arith.extui %35 : vector<8x16xi1> to vector<8x16xi32>
    %37 = arith.sitofp %36 : vector<8x16xi32> to vector<8x16xf32>
    %38 = arith.truncf %37 : vector<8x16xf32> to vector<8x16xbf16>
    %c0_11 = arith.constant 0 : index
    %c0_12 = arith.constant 0 : index
    %c0_13 = arith.constant 0 : index
    %39 = vector.load %arg4[%c0_11, %c0_12, %c0_13] : memref<1x8x16xbf16, #tpu.memory_space<vmem>>, vector<1x8x16xbf16>
    %40 = vector.shape_cast %39 : vector<1x8x16xbf16> to vector<8x16xbf16>
    %41 = vector.shape_cast %38 : vector<8x16xbf16> to vector<1x8x16xbf16>
    tpu.vector_store %arg4[%c0_11, %c0_12, %c0_13], %41 {strides = array<i32>} : memref<1x8x16xbf16, #tpu.memory_space<vmem>>, vector<1x8x16xbf16>,
    %c0_14 = arith.constant 0 : index
    %c0_15 = arith.constant 0 : index
    %42 = vector.load %arg5[%c0_14, %c0_15] : memref<8x16xf32, #tpu.memory_space<vmem>>, vector<8x16xf32>
    tpu.vector_store %arg5[%c0_14, %c0_15], %25 {strides = array<i32>} : memref<8x16xf32, #tpu.memory_space<vmem>>, vector<8x16xf32>,
    %c0_16 = arith.constant 0 : index
    %c0_17 = arith.constant 0 : index
    %43 = vector.load %arg6[%c0_16, %c0_17] : memref<8x16xf32, #tpu.memory_space<vmem>>, vector<8x16xf32>
    tpu.vector_store %arg6[%c0_16, %c0_17], %31 {strides = array<i32>} : memref<8x16xf32, #tpu.memory_space<vmem>>, vector<8x16xf32>,
    return
  }
  func.func @transform_0(%arg0: i32, %arg1: i32) -> i32 {
    %c0_i32 = arith.constant 0 : i32
    %c0_i32_0 = arith.constant 0 : i32
    return %c0_i32 : i32
  }
  func.func @transform_1(%arg0: i32, %arg1: i32) -> (i32, i32, i32) {
    %c0_i32 = arith.constant 0 : i32
    %c0_i32_0 = arith.constant 0 : i32
    return %arg1, %arg0, %c0_i32 : i32, i32, i32
  }
  func.func @transform_2(%arg0: i32, %arg1: i32) -> (i32, i32, i32) {
    %c0_i32 = arith.constant 0 : i32
    %c0_i32_0 = arith.constant 0 : i32
    return %arg1, %arg0, %c0_i32 : i32, i32, i32
  }
  func.func @transform_3(%arg0: i32, %arg1: i32) -> (i32, i32) {
    %c0_i32 = arith.constant 0 : i32
    %c0_i32_0 = arith.constant 0 : i32
    return %arg0, %c0_i32 : i32, i32
  }
  func.func @transform_4(%arg0: i32, %arg1: i32) -> (i32, i32) {
    %c0_i32 = arith.constant 0 : i32
    %c0_i32_0 = arith.constant 0 : i32
    return %arg0, %c0_i32 : i32, i32
  }
}

</mosaic_0001>

<llo_original>
// kernel: tpu_custom_call.1
$region0: #{tpu_custom_call.1}
  #allocation0 [shape = 'u32[]', space=smem, size = 0x4, offset = 0x4, fixed_abs, tag = 'smem constant byte address 0x4 - core index']
  #allocation1 [shape = 'u32[144,128]{1,0:T(1,128)}', space=vmem, size = 0x12000, scoped, tag = 'internal scratch']
  %s0 = inlined_call_operand.hbm [shape: f32[3], index: 0, kind: input, shape index: {}]
  %s1 = inlined_call_operand.hbm [shape: bf16[6,8,32], index: 1, kind: input, shape index: {}]
  %s2 = inlined_call_operand.hbm [shape: bf16[6,8,16], index: 2, kind: output, shape index: {0}]
  %s3 = inlined_call_operand.hbm [shape: f32[8,16], index: 3, kind: output, shape index: {1}]
  %s4 = inlined_call_operand.hbm [shape: f32[8,16], index: 4, kind: output, shape index: {2}]
  %5 = xla_tuple %s2, %s3, %s4
  %s6 = sld [smem:[#allocation0]]
  $region69: #{tpu_custom_call.1} parent=0
    _
  %s8 = ssub.s32 1, %s6
  %s9 = scalar_select 0, %s8, %s6
  $region1: #{tpu_custom_call.1} parent=0
    #allocation2 [shape = 'u8[512]{0}', space=smem, size = 0x200, scoped, tag = 'input window, operand 0, single buffered']
    #allocation3 [shape = 's32[2]{0}', space=sflag, size = 0x8, scoped, tag = 'scoped memory for tpu_custom_call.1']
    #allocation4 [shape = 's32[2]{0}', space=sflag, size = 0x8, scoped, tag = 'scoped memory for tpu_custom_call.1']
    #allocation5 [shape = 's32[2]{0}', space=sflag, size = 0x8, scoped, tag = 'scoped memory for tpu_custom_call.1']
    #allocation6 [shape = 'u8[4096]{0}', space=vmem, size = 0x1000, scoped, tag = 'input window, operand 1']
    #allocation7 [shape = 'u8[4096]{0}', space=vmem, size = 0x1000, scoped, tag = 'output window, operand 0']
    #allocation8 [shape = 'u8[4096]{0}', space=vmem, size = 0x1000, scoped, tag = 'output window, operand 1, single buffered']
    #allocation9 [shape = 's32[1]{0}', space=sflag, size = 0x4, scoped, tag = 'scoped memory for tpu_custom_call.1']
    #allocation10 [shape = 'u8[4096]{0}', space=vmem, size = 0x1000, scoped, tag = 'output window, operand 2, single buffered']
    %10 = vsyncpa [#allocation5], 0
    %11 = vsyncpa [#allocation3], 0
    %s12 = scalar_lea.sflag [#allocation3], 1
    %13 = vsyncpa %s12, 0
    %14 = vsyncpa [#allocation4], 0
    %s15 = scalar_lea.sflag [#allocation4], 1
    %16 = vsyncpa %s15, 0
    %17 = vsyncpa [#allocation9], 0
    loop: start=0, step=1, limit=8
    $region2: #{tpu_custom_call.1} parent=1 // loop_pre_header
      _
    $region3: #{tpu_custom_call.1} parent=1 // loop_header
      %s19 = sphi 0, %s23
      %p20 = scmp.ge.s32.totalorder %s19, 8
      %s26 = sphi 0, %s38
      %s27 = sphi 0, %s34
      %s28 = sphi 0, %s26
      %s29 = sphi 0, %s27
      %s30 = sphi 0, %s28
      %s31 = sphi 0, %s29
      %s39 = sphi 0, %s39
      %s41 = sphi 0, %s39
      %s42 = sphi 0, %s41
      %s56 = sphi 0, %s42
      %s64 = sphi 0, %s66
      %s67 = sphi 0, %s64
      %s68 = sphi 0, %s67
      %s84 = sphi 0, %s68
      %s92 = sphi 0, %s94
      %s95 = sphi 0, %s92
      %s96 = sphi 0, %s95
      %s112 = sphi 0, %s96
      %s118 = sphi 0, %s120
      %s121 = sphi 0, %s118
      %s122 = sphi 0, %s121
      %s138 = sphi 0, %s122
      %s144 = sphi 0, %s146
      %s147 = sphi 0, %s144
      %s148 = sphi 0, %s147
      %s164 = sphi 0, %s148
    $region4: #{tpu_custom_call.1} parent=1 // loop_header_branch
      %22 = sbr.rel (%p20) target = $region8
    $region5: #{tpu_custom_call.1} parent=1 // loop_body
      %s24 = ssub.s32 %s19, 1
      %s25 = ssub.s32 %s19, 2
      %s32 = sadd.s32 1, %s27
      %p33 = scmp.ge.s32.totalorder %s32, 6
      %s34 = scalar_select %p33, 0, %s32
      %s35 = sadd.s32 1, %s26
      %s36 = scalar_select %p33, %s35, %s26
      %p37 = scmp.ge.s32.totalorder %s36, 1
      %s38 = scalar_select %p37, 0, %s36
      %s40 = sadd.s32 %s39, 1
      %p43 = scmp.eq.s32.totalorder %s19, 5
      %p44 = scmp.ne.s32.totalorder %s39, %s41
      %p45 = scmp.eq.s32.totalorder %s19, 0
      %p46 = por %p44, %p45
      %p47 = scmp.ne.s32.totalorder %s39, %s41
      %p48 = scmp.eq.s32.totalorder %s24, 5
      %p49 = por %p47, %p48
      %p50 = scmp.ne.s32.totalorder %s41, %s42
      %p51 = scmp.eq.s32.totalorder %s24, 0
      %p52 = por %p50, %p51
      %p53 = scmp.ne.s32.totalorder %s41, %s42
      %p54 = scmp.eq.s32.totalorder %s25, 5
      %p55 = por %p53, %p54
      %p57 = scmp.ne.s32.totalorder %s42, %s56
      %p58 = scmp.eq.s32.totalorder %s25, 0
      %p59 = por %p57, %p58
      %s60 = ssub.s32 %s27, %s34
      %s61 = ssub.s32 %s26, %s38
      %s62 = sor.u32 %s60, %s61
      %p63 = scmp.eq.s32.totalorder %s62, 0
      %s65 = sadd.s32 %s64, 1
      %s66 = scalar_select %p63, %s64, %s65
      %p69 = pneg %p63
      %p70 = scmp.eq.s32.totalorder %s19, 5
      %p71 = por %p69, %p70
      %p72 = scmp.ne.s32.totalorder %s64, %s67
      %p73 = scmp.eq.s32.totalorder %s19, 0
      %p74 = por %p72, %p73
      %p75 = scmp.ne.s32.totalorder %s64, %s67
      %p76 = scmp.eq.s32.totalorder %s24, 5
      %p77 = por %p75, %p76
      %p78 = scmp.ne.s32.totalorder %s67, %s68
      %p79 = scmp.eq.s32.totalorder %s24, 0
      %p80 = por %p78, %p79
      %p81 = scmp.ne.s32.totalorder %s67, %s68
      %p82 = scmp.eq.s32.totalorder %s25, 5
      %p83 = por %p81, %p82
      %p85 = scmp.ne.s32.totalorder %s68, %s84
      %p86 = scmp.eq.s32.totalorder %s25, 0
      %p87 = por %p85, %p86
      %s88 = ssub.s32 %s27, %s34
      %s89 = ssub.s32 %s26, %s38
      %s90 = sor.u32 %s88, %s89
      %p91 = scmp.eq.s32.totalorder %s90, 0
      %s93 = sadd.s32 %s92, 1
      %s94 = scalar_select %p91, %s92, %s93
      %p97 = pneg %p91
      %p98 = scmp.eq.s32.totalorder %s19, 5
      %p99 = por %p97, %p98
      %p100 = scmp.ne.s32.totalorder %s92, %s95
      %p101 = scmp.eq.s32.totalorder %s19, 0
      %p102 = por %p100, %p101
      %p103 = scmp.ne.s32.totalorder %s92, %s95
      %p104 = scmp.eq.s32.totalorder %s24, 5
      %p105 = por %p103, %p104
      %p106 = scmp.ne.s32.totalorder %s95, %s96
      %p107 = scmp.eq.s32.totalorder %s24, 0
      %p108 = por %p106, %p107
      %p109 = scmp.ne.s32.totalorder %s95, %s96
      %p110 = scmp.eq.s32.totalorder %s25, 5
      %p111 = por %p109, %p110
      %p113 = scmp.ne.s32.totalorder %s96, %s112
      %p114 = scmp.eq.s32.totalorder %s25, 0
      %p115 = por %p113, %p114
      %s116 = ssub.s32 %s26, %s38
      %p117 = scmp.eq.s32.totalorder %s116, 0
      %s119 = sadd.s32 %s118, 1
      %s120 = scalar_select %p117, %s118, %s119
      %p123 = pneg %p117
      %p124 = scmp.eq.s32.totalorder %s19, 5
      %p125 = por %p123, %p124
      %p126 = scmp.ne.s32.totalorder %s118, %s121
      %p127 = scmp.eq.s32.totalorder %s19, 0
      %p128 = por %p126, %p127
      %p129 = scmp.ne.s32.totalorder %s118, %s121
      %p130 = scmp.eq.s32.totalorder %s24, 5
      %p131 = por %p129, %p130
      %p132 = scmp.ne.s32.totalorder %s121, %s122
      %p133 = scmp.eq.s32.totalorder %s24, 0
      %p134 = por %p132, %p133
      %p135 = scmp.ne.s32.totalorder %s121, %s122
      %p136 = scmp.eq.s32.totalorder %s25, 5
      %p137 = por %p135, %p136
      %p139 = scmp.ne.s32.totalorder %s122, %s138
      %p140 = scmp.eq.s32.totalorder %s25, 0
      %p141 = por %p139, %p140
      %s142 = ssub.s32 %s26, %s38
      %p143 = scmp.eq.s32.totalorder %s142, 0
      %s145 = sadd.s32 %s144, 1
      %s146 = scalar_select %p143, %s144, %s145
      %p149 = pneg %p143
      %p150 = scmp.eq.s32.totalorder %s19, 5
      %p151 = por %p149, %p150
      %p152 = scmp.ne.s32.totalorder %s144, %s147
      %p153 = scmp.eq.s32.totalorder %s19, 0
      %p154 = por %p152, %p153
      %p155 = scmp.ne.s32.totalorder %s144, %s147
      %p156 = scmp.eq.s32.totalorder %s24, 5
      %p157 = por %p155, %p156
      %p158 = scmp.ne.s32.totalorder %s147, %s148
      %p159 = scmp.eq.s32.totalorder %s24, 0
      %p160 = por %p158, %p159
      %p161 = scmp.ne.s32.totalorder %s147, %s148
      %p162 = scmp.eq.s32.totalorder %s25, 5
      %p163 = por %p161, %p162
      %p165 = scmp.ne.s32.totalorder %s148, %s164
      %p166 = scmp.eq.s32.totalorder %s25, 0
      %p167 = por %p165, %p166
      %p168 = scmp.le.s32.totalorder 1, %s19
      %p169 = scmp.lt.s32.totalorder %s19, 7
      %p170 = pnand %p168, %p169
      %p171 = pneg %p170
      // Predicated region
      $region9: #{tpu_custom_call.1} parent=5 // pred_check
        _
      $region10: #{tpu_custom_call.1} parent=5 // pred_check_branch
        %173 = sbr.rel (%p170) target = $region12
      $region11: #{tpu_custom_call.1} parent=5 // pred_region
        %s174 = ssub.s32 %s19, 1
        // Predicated region
        $region13: #{tpu_custom_call.1} parent=11 // pred_check
          %p175 = pneg %p52
        $region14: #{tpu_custom_call.1} parent=11 // pred_check_branch
          %177 = sbr.rel (%p175) target = $region16
        $region15: #{tpu_custom_call.1} parent=11 // pred_region
          %s179 = ssub.s32 16, 16
          %180 = vsyncadd [#allocation5], %s179
          %183 = dma.hbm_to_smem %s0, 16, [#allocation2], [#allocation5]
        $region16: #{tpu_custom_call.1} parent=11 // pred_fallthru
          _
      $region12: #{tpu_custom_call.1} parent=5 // pred_fallthru
        _
      %p184 = scmp.lt.s32.totalorder %s19, 6
      // Predicated region
      $region17: #{tpu_custom_call.1} parent=5 // pred_check
        %p185 = pneg %p184
      $region18: #{tpu_custom_call.1} parent=5 // pred_check_branch
        %187 = sbr.rel (%p185) target = $region20
      $region19: #{tpu_custom_call.1} parent=5 // pred_region
        // Predicated region
        $region21: #{tpu_custom_call.1} parent=19 // pred_check
          %p188 = pneg %p74
        $region22: #{tpu_custom_call.1} parent=19 // pred_check_branch
          %190 = sbr.rel (%p188) target = $region24
        $region23: #{tpu_custom_call.1} parent=19 // pred_region
          %s191 = sand.u32 %s64, 1
          %s192 = scalar_lea.sflag [#allocation3], %s191
          %s193 = sand.u32 %s64, 1
          %s194 = smul.addr %s193, 4
          %s195 = scalar_lea.vmem [#allocation6], %s194
          %s197 = ssub.s32 64, 64
          %198 = vsyncadd %s192, %s197
          %s199 = sadd.s32 %s26, %s27
          %s200 = smul.addr %s199, 64
          %s201 = scalar_lea.hbm %s1, %s200
          %s203 = sshll.u32 %s195, 4
          %s204 = int_to_ptr.vmem [resolvable:$true] %s203
          %206 = dma.hbm_to_vmem [thread:$0]  %s201, 64, %s204, %s192
        $region24: #{tpu_custom_call.1} parent=19 // pred_fallthru
          _
      $region20: #{tpu_custom_call.1} parent=5 // pred_fallthru
        _
      %p207 = scmp.le.s32.totalorder 1, %s19
      %p208 = scmp.lt.s32.totalorder %s19, 7
      %p209 = pnand %p207, %p208
      %p210 = pneg %p209
      // Predicated region
      $region25: #{tpu_custom_call.1} parent=5 // pred_check
        _
      $region26: #{tpu_custom_call.1} parent=5 // pred_check_branch
        %212 = sbr.rel (%p209) target = $region28
      $region27: #{tpu_custom_call.1} parent=5 // pred_region
        %s213 = ssub.s32 %s19, 1
        // Predicated region
        $region29: #{tpu_custom_call.1} parent=27 // pred_check
          %p214 = pneg %p52
        $region30: #{tpu_custom_call.1} parent=27 // pred_check_branch
          %216 = sbr.rel (%p214) target = $region32
        $region31: #{tpu_custom_call.1} parent=27 // pred_region
          %217 = dma.done [#allocation5], 16
        $region32: #{tpu_custom_call.1} parent=27 // pred_fallthru
          _
        %s218 = sand.u32 %s67, 1
        %s219 = scalar_lea.sflag [#allocation3], %s218
        %s220 = sand.u32 %s67, 1
        %s221 = smul.addr %s220, 4
        %s222 = scalar_lea.vmem [#allocation6], %s221
        // Predicated region
        $region33: #{tpu_custom_call.1} parent=27 // pred_check
          %p223 = pneg %p80
        $region34: #{tpu_custom_call.1} parent=27 // pred_check_branch
          %225 = sbr.rel (%p223) target = $region36
        $region35: #{tpu_custom_call.1} parent=27 // pred_region
          %226 = dma.done %s219, 64
        $region36: #{tpu_custom_call.1} parent=27 // pred_fallthru
          _
        %227 = sfence
        %p228 = pneg %p52
        %p229 = pneg %p49
        %s230 = sand.u32 %s67, 1
        %s231 = scalar_lea.sflag [#allocation3], %s230
        %s232 = sand.u32 %s67, 1
        %s233 = smul.addr %s232, 4
        %s234 = scalar_lea.vmem [#allocation6], %s233
        %p235 = pneg %p80
        %p236 = pneg %p77
        %p237 = pneg %p108
        %p238 = pneg %p105
        %s239 = sand.u32 %s95, 1
        %s240 = scalar_lea.sflag [#allocation4], %s239
        %s241 = sand.u32 %s95, 1
        %s242 = smul.addr %s241, 4
        %s243 = scalar_lea.vmem [#allocation7], %s242
        %p244 = pneg %p134
        %p245 = pneg %p131
        %p246 = pneg %p160
        %p247 = pneg %p157
        %v248 = vld [vmem:[%s222] sm:$0xf]
        %v249 = vunpack.c.l.bf16 %v248
        %vm250 = vcmask 261120
        %v251 = vsel %vm250, %v249, 0.0
        %252 = vadd.xlane.f32.xlu0 %v251
        %v253 = vpop.xlane.xlu0 %252
        %v254 = vsub.f32 0.0, %v253
        %p255 = scmp.eq.s32.totalorder %s29, 0
        // Predicated region
        $region37: #{tpu_custom_call.1} parent=27 // pred_check
          %p256 = pneg %p255
        $region38: #{tpu_custom_call.1} parent=27 // pred_check_branch
          %258 = sbr.rel (%p256) target = $region40
        $region39: #{tpu_custom_call.1} parent=27 // pred_region
          %vm259 = vcmask 130048
          %260 = vst.msk [vmem:[#allocation8] sm:$0xff] %vm259, 0.0
          %261 = vst.msk [vmem:[#allocation10] sm:$0xff] %vm259, 0.0
        $region40: #{tpu_custom_call.1} parent=27 // pred_fallthru
          _
        %s262 = sld [smem:[#allocation2]]
        %s263 = sld [smem:[#allocation2 + $0x1]]
        %s264 = sld [smem:[#allocation2 + $0x2]]
        %v265 = vld [vmem:[#allocation8] sm:$0xff]
        %v266 = vld [vmem:[#allocation10] sm:$0xff]
        %v267 = vstv %s264
        %v268 = vsub.f32 %v266, %v267
        %vm269 = vcmp.gt.f32.partialorder %v268, 0.0
        %v270 = vsel %vm269, 1, 0
        %v271 = vcvt.s32.f32 %v270
        %v272 = vstv %s262
        %v273 = vmul.f32 %v272, %v265
        %v274 = vadd.f32 %v273, %v254
        %v275 = vstv %s263
        %v276 = vmul.f32 %v275, %v266
        %v277 = vadd.f32 %v276, %v274
        %v278 = vmul.f32 %v271, %v267
        %v279 = vsub.f32 %v277, %v278
        %v280 = vsub.f32 %v279, %v267
        %vm281 = vcmp.gt.f32.partialorder %v280, 0.0
        %v282 = vsel %vm281, 1, 0
        %v283 = vcvt.s32.f32 %v282
        %v284 = vpack.c.bf16 %v283, %v283
        %vm285 = vcmask 125952
        %286 = vst.msk [vmem:[%s243] sm:$0xf] %vm285, %v284
        %vm287 = vcmask 130048
        %288 = vst.msk [vmem:[#allocation8] sm:$0xff] %vm287, %v274
        %289 = vst.msk [vmem:[#allocation10] sm:$0xff] %vm287, %v279
        %s290 = sand.u32 %s95, 1
        %s291 = scalar_lea.sflag [#allocation4], %s290
        %s292 = sand.u32 %s95, 1
        %s293 = smul.addr %s292, 4
        %s294 = scalar_lea.vmem [#allocation7], %s293
        // Predicated region
        $region41: #{tpu_custom_call.1} parent=27 // pred_check
          %p295 = pneg %p105
        $region42: #{tpu_custom_call.1} parent=27 // pred_check_branch
          %297 = sbr.rel (%p295) target = $region44
        $region43: #{tpu_custom_call.1} parent=27 // pred_region
          %s299 = ssub.s32 64, 64
          %300 = vsyncadd %s291, %s299
          %s301 = sadd.s32 %s28, %s29
          %s302 = smul.addr %s301, 64
          %s303 = scalar_lea.hbm %s2, %s302
          %s305 = sshll.u32 %s294, 4
          %s306 = int_to_ptr.vmem [resolvable:$true] %s305
          %308 = dma.vmem_to_hbm [thread:$0]  %s306, 64, %s303, %s291
        $region44: #{tpu_custom_call.1} parent=27 // pred_fallthru
          _
        // Predicated region
        $region45: #{tpu_custom_call.1} parent=27 // pred_check
          %p309 = pneg %p131
        $region46: #{tpu_custom_call.1} parent=27 // pred_check_branch
          %311 = sbr.rel (%p309) target = $region48
        $region47: #{tpu_custom_call.1} parent=27 // pred_region
          %s313 = ssub.s32 128, 128
          %314 = vsyncadd [#allocation9], %s313
          %s315 = smul.addr %s28, 128
          %s316 = scalar_lea.hbm %s3, %s315
          %s318 = sshll.u32 [#allocation8], 4
          %s319 = int_to_ptr.vmem [resolvable:$true] %s318
          %321 = dma.vmem_to_hbm [thread:$0]  %s319, 128, %s316, [#allocation9]
        $region48: #{tpu_custom_call.1} parent=27 // pred_fallthru
          _
        // Predicated region
        $region49: #{tpu_custom_call.1} parent=27 // pred_check
          %p322 = pneg %p157
        $region50: #{tpu_custom_call.1} parent=27 // pred_check_branch
          %324 = sbr.rel (%p322) target = $region52
        $region51: #{tpu_custom_call.1} parent=27 // pred_region
          %s326 = ssub.s32 128, 128
          %327 = vsyncadd [#allocation9], %s326
          %s328 = smul.addr %s28, 128
          %s329 = scalar_lea.hbm %s4, %s328
          %s331 = sshll.u32 [#allocation10], 4
          %s332 = int_to_ptr.vmem [resolvable:$true] %s331
          %334 = dma.vmem_to_hbm [thread:$0]  %s332, 128, %s329, [#allocation9]
        $region52: #{tpu_custom_call.1} parent=27 // pred_fallthru
          _
        // Predicated region
        $region53: #{tpu_custom_call.1} parent=27 // pred_check
          %p335 = pneg %p131
        $region54: #{tpu_custom_call.1} parent=27 // pred_check_branch
          %337 = sbr.rel (%p335) target = $region56
        $region55: #{tpu_custom_call.1} parent=27 // pred_region
          %338 = dma.done [#allocation9], 128
        $region56: #{tpu_custom_call.1} parent=27 // pred_fallthru
          _
        // Predicated region
        $region57: #{tpu_custom_call.1} parent=27 // pred_check
          %p339 = pneg %p157
        $region58: #{tpu_custom_call.1} parent=27 // pred_check_branch
          %341 = sbr.rel (%p339) target = $region60
        $region59: #{tpu_custom_call.1} parent=27 // pred_region
          %342 = dma.done [#allocation9], 128
        $region60: #{tpu_custom_call.1} parent=27 // pred_fallthru
          _
      $region28: #{tpu_custom_call.1} parent=5 // pred_fallthru
        _
      %p343 = scmp.le.s32.totalorder 2, %s19
      // Predicated region
      $region61: #{tpu_custom_call.1} parent=5 // pred_check
        %p344 = pneg %p343
      $region62: #{tpu_custom_call.1} parent=5 // pred_check_branch
        %346 = sbr.rel (%p344) target = $region64
      $region63: #{tpu_custom_call.1} parent=5 // pred_region
        %s347 = ssub.s32 %s19, 2
        // Predicated region
        $region65: #{tpu_custom_call.1} parent=63 // pred_check
          %p348 = pneg %p111
        $region66: #{tpu_custom_call.1} parent=63 // pred_check_branch
          %350 = sbr.rel (%p348) target = $region68
        $region67: #{tpu_custom_call.1} parent=63 // pred_region
          %s351 = sand.u32 %s96, 1
          %s352 = scalar_lea.sflag [#allocation4], %s351
          %s353 = sand.u32 %s96, 1
          %s354 = smul.addr %s353, 4
          %s355 = scalar_lea.vmem [#allocation7], %s354
          %356 = dma.done %s352, 64
        $region68: #{tpu_custom_call.1} parent=63 // pred_fallthru
          _
      $region64: #{tpu_custom_call.1} parent=5 // pred_fallthru
        _
    $region6: #{tpu_custom_call.1} parent=1 // loop_footer
      %s23 = sadd.s32 1, %s19
    $region7: #{tpu_custom_call.1} parent=1 // loop_footer_branch
      %18 = sbr.rel target = $region3
    $region8: #{tpu_custom_call.1} parent=1 // loop_exit
      _
    %357 = vsyncpa [#allocation3], 1
    %s358 = scalar_lea.sflag [#allocation3], 1
    %359 = vsyncpa %s358, 1
    %360 = vsyncpa [#allocation4], 1
    %s361 = scalar_lea.sflag [#allocation4], 1
    %362 = vsyncpa %s361, 1
    %363 = vsyncpa [#allocation9], 1
    %364 = vsyncpa [#allocation5], 1
    %s365 = scalar_lea.sflag [#allocation5], 1
    %366 = vsyncpa %s365, 1

</llo_original>
